<compile_context>
chip_gen: v7x
topology: tpu7x:2x2x1
jax: 0.10.0
libtpu: 0.0.40
codegen_flags: <defaults>
</compile_context>

<pallas_src>
import jax
import jax.numpy as jnp
from jax.experimental import pallas as pl
from jax.experimental.pallas import tpu as pltpu


def _fused_conv_add_relu_kernel(x2_ref, x3_ref, w2_ref, w1_ref, b_ref, o_ref):
    # x2_ref: (B_blk, C2, t_hw), x3_ref: (B_blk, C3, t_hw)
    # w2_ref: (Cout, C2), w1_ref: (Cout, C3), b_ref: (Cout, 1) = b1 + b2
    w2 = w2_ref[...]
    w1 = w1_ref[...]
    bias = b_ref[...]
    # Static unrolled loop over the per-step image block: plain (Cout,Cin)@
    # (Cin,t_hw) dots keep the lane axis in place (no batched-dot transpose).
    for b in range(x2_ref.shape[0]):
        acc = jnp.dot(w2, x2_ref[b], preferred_element_type=jnp.float32)
        acc = acc + jnp.dot(w1, x3_ref[b], preferred_element_type=jnp.float32)
        acc = acc + bias                     # (Cout,1) broadcasts over lanes
        o_ref[b] = jnp.maximum(acc, 0.0).astype(o_ref.dtype)


def _choose_tiles(N, HW, lane_cap):
    """Pick (b_blk, t_hw): lane tile multiple of 128, batch-block small images,
    and keep >= 2 grid steps so both v7x TensorCores get work."""
    t_hw = min(lane_cap, pl.cdiv(HW, 128) * 128)
    b_blk = max(1, min(N, lane_cap // t_hw))

    def n_steps(bb, th):
        return pl.cdiv(N, bb) * pl.cdiv(HW, th)

    while n_steps(b_blk, t_hw) < 2:
        if b_blk > 1:
            b_blk = (b_blk + 1) // 2
        elif t_hw > 128 and HW > 128:
            t_hw = pl.cdiv(pl.cdiv(t_hw, 2), 128) * 128
        else:
            break  # problem genuinely fits a single tiny step
    return b_blk, t_hw


def fused_conv_add_relu(x2_nchw, x3_nchw, w2, b2, w1, b1, *, lane_cap=8192):
    """relu(conv2d_1x1(x2, w2, b2) + conv2d_1x1(x3, w1, b1)), NCHW in/out.

    x2_nchw: (N, C2, H, W)   x3_nchw: (N, C3, H, W)
    w2: (Cout, C2, 1, 1)  b2: (Cout,)
    w1: (Cout, C3, 1, 1)  b1: (Cout,)
    returns: (N, Cout, H, W)
    """
    N, C2, H, W = x2_nchw.shape
    _, C3, _, _ = x3_nchw.shape
    Cout = w2.shape[0]
    HW = H * W

    # NCHW is contiguous as (N, C, H*W): these reshapes are metadata-only.
    x2_m = x2_nchw.reshape(N, C2, HW)
    x3_m = x3_nchw.reshape(N, C3, HW)

    b_blk, t_hw = _choose_tiles(N, HW, lane_cap)
    grid = (pl.cdiv(N, b_blk), pl.cdiv(HW, t_hw))

    w2_mat = w2.reshape(Cout, C2)            # (Cout, C2), VMEM-resident
    w1_mat = w1.reshape(Cout, C3)            # (Cout, C3), VMEM-resident
    bias = (b1 + b2).reshape(Cout, 1)        # combined bias, exact pre-relu

    out = pl.pallas_call(
        _fused_conv_add_relu_kernel,
        out_shape=jax.ShapeDtypeStruct((N, Cout, HW), x2_nchw.dtype),
        grid_spec=pltpu.PrefetchScalarGridSpec(
            num_scalar_prefetch=0,
            grid=grid,
            in_specs=[
                pl.BlockSpec((b_blk, C2, t_hw), lambda n, j: (n, 0, j)),
                pl.BlockSpec((b_blk, C3, t_hw), lambda n, j: (n, 0, j)),
                pl.BlockSpec((Cout, C2), lambda n, j: (0, 0)),
                pl.BlockSpec((Cout, C3), lambda n, j: (0, 0)),
                pl.BlockSpec((Cout, 1), lambda n, j: (0, 0)),
            ],
            out_specs=pl.BlockSpec((b_blk, Cout, t_hw), lambda n, j: (n, 0, j)),
        ),
        compiler_params=pltpu.CompilerParams(
            dimension_semantics=("parallel", "parallel"),
            # ~12.6 MiB double-buffered working set at lane_cap=8192; raise the
            # scoped-VMEM limit explicitly so v5e's 16 MiB default isn't tight.
            vmem_limit_bytes=64 * 1024 * 1024,
        ),
    )(x2_m, x3_m, w2_mat, w1_mat, bias)

    return out.reshape(N, Cout, H, W)


def _reference(x2, x3, w2, b2, w1, b1):
    Cout = w2.shape[0]
    v1 = jnp.einsum("nchw,oc->nohw", x3, w1.reshape(Cout, -1)) + b1[None, :, None, None]
    v2 = jnp.einsum("nchw,oc->nohw", x2, w2.reshape(Cout, -1)) + b2[None, :, None, None]
    return jnp.maximum(v1 + v2, 0.0)


if __name__ == "__main__":
    key = jax.random.PRNGKey(0)
    k_x2, k_x3, k_w1, k_b1, k_w2, k_b2, k_x2b, k_x3b = jax.random.split(key, 8)

    # Small shapes consistent with the forward: x2 feeds conv2 (32 in-ch),
    # x3 feeds conv1 (128 in-ch), same batch/spatial so the add is exact.
    N, H, W = 2, 16, 16
    C2, C3, Cout = 32, 128, 32

    x2 = jax.random.normal(k_x2, (N, C2, H, W), jnp.float32)
    x3 = jax.random.normal(k_x3, (N, C3, H, W), jnp.float32)

    # Deterministic parameter init (conv weights are (out, in, 1, 1)).
    w1 = 0.05 * jax.random.normal(k_w1, (Cout, C3, 1, 1), jnp.float32)
    b1 = 0.05 * jax.random.normal(k_b1, (Cout,), jnp.float32)
    w2 = 0.05 * jax.random.normal(k_w2, (Cout, C2, 1, 1), jnp.float32)
    b2 = 0.05 * jax.random.normal(k_b2, (Cout,), jnp.float32)

    out = fused_conv_add_relu(x2, x3, w2, b2, w1, b1)
    out = jax.block_until_ready(out)
    ref = _reference(x2, x3, w2, b2, w1, b1)
    assert out.shape == (N, Cout, H, W)
    assert jnp.allclose(out, ref, atol=1e-4, rtol=1e-4)

    # Second check: ragged batch (N=3 with b_blk=2) and ragged lanes
    # (HW=225, not a multiple of 128) — exercises the masked edge-block path
    # that replaced the wrapper-side pad/slice round-trips.
    N2, H2, W2 = 3, 15, 15
    x2b = jax.random.normal(k_x2b, (N2, C2, H2, W2), jnp.float32)
    x3b = jax.random.normal(k_x3b, (N2, C3, H2, W2), jnp.float32)
    outb = jax.block_until_ready(fused_conv_add_relu(x2b, x3b, w2, b2, w1, b1))
    refb = _reference(x2b, x3b, w2, b2, w1, b1)
    assert outb.shape == (N2, Cout, H2, W2)
    assert jnp.allclose(outb, refb, atol=1e-4, rtol=1e-4)

    print("KERNEL_OK")
</pallas_src>

<mosaic_0001>
module attributes {stable_mosaic.version = 11 : i64} {
  func.func @_fused_conv_add_relu_kernel(%arg0: i32, %arg1: i32, %arg2: memref<1x32x256xf32, #tpu.memory_space<vmem>>, %arg3: memref<1x128x256xf32, #tpu.memory_space<vmem>>, %arg4: memref<32x32xf32, #tpu.memory_space<vmem>>, %arg5: memref<32x128xf32, #tpu.memory_space<vmem>>, %arg6: memref<32x1xf32, #tpu.memory_space<vmem>>, %arg7: memref<1x32x256xf32, #tpu.memory_space<vmem>>) attributes {dimension_semantics = [#tpu.dimension_semantics<parallel>, #tpu.dimension_semantics<parallel>], iteration_bounds = array<i64: 2, 1>, scalar_prefetch = 0 : i64, scratch_operands = 0 : i64, tpu.core_type = #tpu.core_type<tc>, window_params = [{transform_indices = @transform_0, window_bounds = array<i64: 1, 32, 256>}, {transform_indices = @transform_1, window_bounds = array<i64: 1, 128, 256>}, {pipeline_mode = #tpu.pipeline_mode<synchronous>, transform_indices = @transform_2, window_bounds = array<i64: 32, 32>}, {pipeline_mode = #tpu.pipeline_mode<synchronous>, transform_indices = @transform_3, window_bounds = array<i64: 32, 128>}, {pipeline_mode = #tpu.pipeline_mode<synchronous>, transform_indices = @transform_4, window_bounds = array<i64: 32, 1>}, {transform_indices = @transform_5, window_bounds = array<i64: 1, 32, 256>}]} {
    %c0 = arith.constant 0 : index
    %c0_0 = arith.constant 0 : index
    %0 = vector.load %arg4[%c0, %c0_0] : memref<32x32xf32, #tpu.memory_space<vmem>>, vector<32x32xf32>
    %c0_1 = arith.constant 0 : index
    %c0_2 = arith.constant 0 : index
    %1 = vector.load %arg5[%c0_1, %c0_2] : memref<32x128xf32, #tpu.memory_space<vmem>>, vector<32x128xf32>
    %c0_3 = arith.constant 0 : index
    %c0_4 = arith.constant 0 : index
    %2 = vector.load %arg6[%c0_3, %c0_4] : memref<32x1xf32, #tpu.memory_space<vmem>>, vector<32x1xf32>
    %c0_5 = arith.constant 0 : index
    %c0_6 = arith.constant 0 : index
    %c0_7 = arith.constant 0 : index
    %3 = vector.load %arg2[%c0_5, %c0_6, %c0_7] : memref<1x32x256xf32, #tpu.memory_space<vmem>>, vector<1x32x256xf32>
    %4 = vector.shape_cast %3 : vector<1x32x256xf32> to vector<32x256xf32>
    %cst = arith.constant dense<0.000000e+00> : vector<32x256xf32>
    %5 = tpu.matmul %0, %4, %cst {dimension_numbers = #tpu.dot_dimension_numbers<[1], [0], [0], [1], [0, 0, 1, 1], [], []>} : vector<32x32xf32>, vector<32x256xf32>, vector<32x256xf32> -> vector<32x256xf32>
    %c0_8 = arith.constant 0 : index
    %c0_9 = arith.constant 0 : index
    %c0_10 = arith.constant 0 : index
    %6 = vector.load %arg3[%c0_8, %c0_9, %c0_10] : memref<1x128x256xf32, #tpu.memory_space<vmem>>, vector<1x128x256xf32>
    %7 = vector.shape_cast %6 : vector<1x128x256xf32> to vector<128x256xf32>
    %cst_11 = arith.constant dense<0.000000e+00> : vector<32x256xf32>
    %8 = tpu.matmul %1, %7, %cst_11 {dimension_numbers = #tpu.dot_dimension_numbers<[1], [0], [0], [1], [0, 0, 1, 1], [], []>} : vector<32x128xf32>, vector<128x256xf32>, vector<32x256xf32> -> vector<32x256xf32>
    %9 = arith.addf %5, %8 : vector<32x256xf32>
    %10 = vector.broadcast %2 : vector<32x1xf32> to vector<32x256xf32>
    %11 = arith.addf %9, %10 : vector<32x256xf32>
    %cst_12 = arith.constant 0.000000e+00 : f32
    %12 = vector.broadcast %cst_12 : f32 to vector<32x256xf32>
    %13 = arith.maximumf %11, %12 : vector<32x256xf32>
    %c0_13 = arith.constant 0 : index
    %c0_14 = arith.constant 0 : index
    %c0_15 = arith.constant 0 : index
    %14 = vector.load %arg7[%c0_13, %c0_14, %c0_15] : memref<1x32x256xf32, #tpu.memory_space<vmem>>, vector<1x32x256xf32>
    %15 = vector.shape_cast %14 : vector<1x32x256xf32> to vector<32x256xf32>
    %16 = vector.shape_cast %13 : vector<32x256xf32> to vector<1x32x256xf32>
    tpu.vector_store %arg7[%c0_13, %c0_14, %c0_15], %16 {strides = array<i32>} : memref<1x32x256xf32, #tpu.memory_space<vmem>>, vector<1x32x256xf32>,
    return
  }
  func.func @transform_0(%arg0: i32, %arg1: i32) -> (i32, i32, i32) {
    %c0_i32 = arith.constant 0 : i32
    %c0_i32_0 = arith.constant 0 : i32
    return %arg0, %c0_i32, %arg1 : i32, i32, i32
  }
  func.func @transform_1(%arg0: i32, %arg1: i32) -> (i32, i32, i32) {
    %c0_i32 = arith.constant 0 : i32
    %c0_i32_0 = arith.constant 0 : i32
    return %arg0, %c0_i32, %arg1 : i32, i32, i32
  }
  func.func @transform_2(%arg0: i32, %arg1: i32) -> (i32, i32) {
    %c0_i32 = arith.constant 0 : i32
    %c0_i32_0 = arith.constant 0 : i32
    %c0_i32_1 = arith.constant 0 : i32
    return %c0_i32, %c0_i32_0 : i32, i32
  }
  func.func @transform_3(%arg0: i32, %arg1: i32) -> (i32, i32) {
    %c0_i32 = arith.constant 0 : i32
    %c0_i32_0 = arith.constant 0 : i32
    %c0_i32_1 = arith.constant 0 : i32
    return %c0_i32, %c0_i32_0 : i32, i32
  }
  func.func @transform_4(%arg0: i32, %arg1: i32) -> (i32, i32) {
    %c0_i32 = arith.constant 0 : i32
    %c0_i32_0 = arith.constant 0 : i32
    %c0_i32_1 = arith.constant 0 : i32
    return %c0_i32, %c0_i32_0 : i32, i32
  }
  func.func @transform_5(%arg0: i32, %arg1: i32) -> (i32, i32, i32) {
    %c0_i32 = arith.constant 0 : i32
    %c0_i32_0 = arith.constant 0 : i32
    return %arg0, %c0_i32, %arg1 : i32, i32, i32
  }
}

</mosaic_0001>

<llo_original>
// kernel: tpu_custom_call.1
$region0: #{tpu_custom_call.1}
  #allocation0 [shape = 'u32[]', space=smem, size = 0x4, offset = 0x4, fixed_abs, tag = 'smem constant byte address 0x4 - core index']
  #allocation1 [shape = 'u32[144,128]{1,0:T(1,128)}', space=vmem, size = 0x12000, scoped, tag = 'internal scratch']
  %s0 = inlined_call_operand.hbm [shape: f32[2,32,256], index: 0, kind: input, shape index: {}]
  %s1 = inlined_call_operand.hbm [shape: f32[2,128,256], index: 1, kind: input, shape index: {}]
  %s2 = inlined_call_operand.hbm [shape: f32[32,32], index: 2, kind: input, shape index: {}]
  %s3 = inlined_call_operand.hbm [shape: f32[32,128], index: 3, kind: input, shape index: {}]
  %s4 = inlined_call_operand.hbm [shape: f32[32,1], index: 4, kind: input, shape index: {}]
  %s5 = inlined_call_operand.hbm [shape: f32[2,32,256], index: 5, kind: output, shape index: {}]
  %s6 = sld [smem:[#allocation0]]
  $region73: #{tpu_custom_call.1} parent=0
    _
  %s8 = ssub.s32 1, %s6
  %s9 = scalar_select 0, %s8, %s6
  $region1: #{tpu_custom_call.1} parent=0
    #allocation2 [shape = 'u8[65536]{0}', space=vmem, size = 0x10000, scoped, tag = 'input window, operand 0']
    #allocation3 [shape = 's32[2]{0}', space=sflag, size = 0x8, scoped, tag = 'scoped memory for tpu_custom_call.1']
    #allocation4 [shape = 's32[2]{0}', space=sflag, size = 0x8, scoped, tag = 'scoped memory for tpu_custom_call.1']
    #allocation5 [shape = 'u8[262144]{0}', space=vmem, size = 0x40000, scoped, tag = 'input window, operand 1']
    #allocation6 [shape = 's32[2]{0}', space=sflag, size = 0x8, scoped, tag = 'scoped memory for tpu_custom_call.1']
    #allocation7 [shape = 'u8[16384]{0}', space=vmem, size = 0x4000, scoped, tag = 'input window, operand 2, single buffered']
    #allocation8 [shape = 'u8[16384]{0}', space=vmem, size = 0x4000, scoped, tag = 'input window, operand 3, single buffered']
    #allocation9 [shape = 's32[1]{0}', space=sflag, size = 0x4, scoped, tag = 'scoped memory for tpu_custom_call.1']
    #allocation10 [shape = 'u8[16384]{0}', space=vmem, size = 0x4000, scoped, tag = 'input window, operand 4, single buffered']
    #allocation11 [shape = 'u8[65536]{0}', space=vmem, size = 0x10000, scoped, tag = 'output window, operand 0']
    %10 = vsyncpa [#allocation3], 0
    %s11 = scalar_lea.sflag [#allocation3], 1
    %12 = vsyncpa %s11, 0
    %13 = vsyncpa [#allocation6], 0
    %s14 = scalar_lea.sflag [#allocation6], 1
    %15 = vsyncpa %s14, 0
    %16 = vsyncpa [#allocation9], 0
    %17 = vsyncpa [#allocation4], 0
    %s18 = scalar_lea.sflag [#allocation4], 1
    %19 = vsyncpa %s18, 0
    loop: start=0, step=1, limit=4
    $region2: #{tpu_custom_call.1} parent=1 // loop_pre_header
      _
    $region3: #{tpu_custom_call.1} parent=1 // loop_header
      %s21 = sphi 0, %s25
      %p22 = scmp.ge.s32.totalorder %s21, 4
      %s28 = sphi 0, %s40
      %s29 = sphi 0, %s36
      %s30 = sphi 0, %s28
      %s31 = sphi 0, %s29
      %s32 = sphi 0, %s30
      %s33 = sphi 0, %s31
      %s45 = sphi 0, %s47
      %s48 = sphi 0, %s45
      %s49 = sphi 0, %s48
      %s65 = sphi 0, %s49
      %s73 = sphi 0, %s75
      %s76 = sphi 0, %s73
      %s77 = sphi 0, %s76
      %s93 = sphi 0, %s77
      %s97 = sphi 0, %s97
      %s99 = sphi 0, %s97
      %s100 = sphi 0, %s99
      %s114 = sphi 0, %s100
      %s118 = sphi 0, %s118
      %s120 = sphi 0, %s118
      %s121 = sphi 0, %s120
      %s135 = sphi 0, %s121
      %s139 = sphi 0, %s139
      %s141 = sphi 0, %s139
      %s142 = sphi 0, %s141
      %s156 = sphi 0, %s142
      %s164 = sphi 0, %s166
      %s167 = sphi 0, %s164
      %s168 = sphi 0, %s167
      %s184 = sphi 0, %s168
    $region4: #{tpu_custom_call.1} parent=1 // loop_header_branch
      %24 = sbr.rel (%p22) target = $region8
    $region5: #{tpu_custom_call.1} parent=1 // loop_body
      %s26 = ssub.s32 %s21, 1
      %s27 = ssub.s32 %s21, 2
      %s34 = sadd.s32 1, %s29
      %p35 = scmp.ge.s32.totalorder %s34, 1
      %s36 = scalar_select %p35, 0, %s34
      %s37 = sadd.s32 1, %s28
      %s38 = scalar_select %p35, %s37, %s28
      %p39 = scmp.ge.s32.totalorder %s38, 2
      %s40 = scalar_select %p39, 0, %s38
      %s41 = ssub.s32 %s28, %s40
      %s42 = ssub.s32 %s29, %s36
      %s43 = sor.u32 %s41, %s42
      %p44 = scmp.eq.s32.totalorder %s43, 0
      %s46 = sadd.s32 %s45, 1
      %s47 = scalar_select %p44, %s45, %s46
      %p50 = pneg %p44
      %p51 = scmp.eq.s32.totalorder %s21, 1
      %p52 = por %p50, %p51
      %p53 = scmp.ne.s32.totalorder %s45, %s48
      %p54 = scmp.eq.s32.totalorder %s21, 0
      %p55 = por %p53, %p54
      %p56 = scmp.ne.s32.totalorder %s45, %s48
      %p57 = scmp.eq.s32.totalorder %s26, 1
      %p58 = por %p56, %p57
      %p59 = scmp.ne.s32.totalorder %s48, %s49
      %p60 = scmp.eq.s32.totalorder %s26, 0
      %p61 = por %p59, %p60
      %p62 = scmp.ne.s32.totalorder %s48, %s49
      %p63 = scmp.eq.s32.totalorder %s27, 1
      %p64 = por %p62, %p63
      %p66 = scmp.ne.s32.totalorder %s49, %s65
      %p67 = scmp.eq.s32.totalorder %s27, 0
      %p68 = por %p66, %p67
      %s69 = ssub.s32 %s28, %s40
      %s70 = ssub.s32 %s29, %s36
      %s71 = sor.u32 %s69, %s70
      %p72 = scmp.eq.s32.totalorder %s71, 0
      %s74 = sadd.s32 %s73, 1
      %s75 = scalar_select %p72, %s73, %s74
      %p78 = pneg %p72
      %p79 = scmp.eq.s32.totalorder %s21, 1
      %p80 = por %p78, %p79
      %p81 = scmp.ne.s32.totalorder %s73, %s76
      %p82 = scmp.eq.s32.totalorder %s21, 0
      %p83 = por %p81, %p82
      %p84 = scmp.ne.s32.totalorder %s73, %s76
      %p85 = scmp.eq.s32.totalorder %s26, 1
      %p86 = por %p84, %p85
      %p87 = scmp.ne.s32.totalorder %s76, %s77
      %p88 = scmp.eq.s32.totalorder %s26, 0
      %p89 = por %p87, %p88
      %p90 = scmp.ne.s32.totalorder %s76, %s77
      %p91 = scmp.eq.s32.totalorder %s27, 1
      %p92 = por %p90, %p91
      %p94 = scmp.ne.s32.totalorder %s77, %s93
      %p95 = scmp.eq.s32.totalorder %s27, 0
      %p96 = por %p94, %p95
      %s98 = sadd.s32 %s97, 1
      %p101 = scmp.eq.s32.totalorder %s21, 1
      %p102 = scmp.ne.s32.totalorder %s97, %s99
      %p103 = scmp.eq.s32.totalorder %s21, 0
      %p104 = por %p102, %p103
      %p105 = scmp.ne.s32.totalorder %s97, %s99
      %p106 = scmp.eq.s32.totalorder %s26, 1
      %p107 = por %p105, %p106
      %p108 = scmp.ne.s32.totalorder %s99, %s100
      %p109 = scmp.eq.s32.totalorder %s26, 0
      %p110 = por %p108, %p109
      %p111 = scmp.ne.s32.totalorder %s99, %s100
      %p112 = scmp.eq.s32.totalorder %s27, 1
      %p113 = por %p111, %p112
      %p115 = scmp.ne.s32.totalorder %s100, %s114
      %p116 = scmp.eq.s32.totalorder %s27, 0
      %p117 = por %p115, %p116
      %s119 = sadd.s32 %s118, 1
      %p122 = scmp.eq.s32.totalorder %s21, 1
      %p123 = scmp.ne.s32.totalorder %s118, %s120
      %p124 = scmp.eq.s32.totalorder %s21, 0
      %p125 = por %p123, %p124
      %p126 = scmp.ne.s32.totalorder %s118, %s120
      %p127 = scmp.eq.s32.totalorder %s26, 1
      %p128 = por %p126, %p127
      %p129 = scmp.ne.s32.totalorder %s120, %s121
      %p130 = scmp.eq.s32.totalorder %s26, 0
      %p131 = por %p129, %p130
      %p132 = scmp.ne.s32.totalorder %s120, %s121
      %p133 = scmp.eq.s32.totalorder %s27, 1
      %p134 = por %p132, %p133
      %p136 = scmp.ne.s32.totalorder %s121, %s135
      %p137 = scmp.eq.s32.totalorder %s27, 0
      %p138 = por %p136, %p137
      %s140 = sadd.s32 %s139, 1
      %p143 = scmp.eq.s32.totalorder %s21, 1
      %p144 = scmp.ne.s32.totalorder %s139, %s141
      %p145 = scmp.eq.s32.totalorder %s21, 0
      %p146 = por %p144, %p145
      %p147 = scmp.ne.s32.totalorder %s139, %s141
      %p148 = scmp.eq.s32.totalorder %s26, 1
      %p149 = por %p147, %p148
      %p150 = scmp.ne.s32.totalorder %s141, %s142
      %p151 = scmp.eq.s32.totalorder %s26, 0
      %p152 = por %p150, %p151
      %p153 = scmp.ne.s32.totalorder %s141, %s142
      %p154 = scmp.eq.s32.totalorder %s27, 1
      %p155 = por %p153, %p154
      %p157 = scmp.ne.s32.totalorder %s142, %s156
      %p158 = scmp.eq.s32.totalorder %s27, 0
      %p159 = por %p157, %p158
      %s160 = ssub.s32 %s28, %s40
      %s161 = ssub.s32 %s29, %s36
      %s162 = sor.u32 %s160, %s161
      %p163 = scmp.eq.s32.totalorder %s162, 0
      %s165 = sadd.s32 %s164, 1
      %s166 = scalar_select %p163, %s164, %s165
      %p169 = pneg %p163
      %p170 = scmp.eq.s32.totalorder %s21, 1
      %p171 = por %p169, %p170
      %p172 = scmp.ne.s32.totalorder %s164, %s167
      %p173 = scmp.eq.s32.totalorder %s21, 0
      %p174 = por %p172, %p173
      %p175 = scmp.ne.s32.totalorder %s164, %s167
      %p176 = scmp.eq.s32.totalorder %s26, 1
      %p177 = por %p175, %p176
      %p178 = scmp.ne.s32.totalorder %s167, %s168
      %p179 = scmp.eq.s32.totalorder %s26, 0
      %p180 = por %p178, %p179
      %p181 = scmp.ne.s32.totalorder %s167, %s168
      %p182 = scmp.eq.s32.totalorder %s27, 1
      %p183 = por %p181, %p182
      %p185 = scmp.ne.s32.totalorder %s168, %s184
      %p186 = scmp.eq.s32.totalorder %s27, 0
      %p187 = por %p185, %p186
      %p188 = scmp.le.s32.totalorder 1, %s21
      %p189 = scmp.lt.s32.totalorder %s21, 3
      %p190 = pnand %p188, %p189
      %p191 = pneg %p190
      // Predicated region
      $region9: #{tpu_custom_call.1} parent=5 // pred_check
        _
      $region10: #{tpu_custom_call.1} parent=5 // pred_check_branch
        %193 = sbr.rel (%p190) target = $region12
      $region11: #{tpu_custom_call.1} parent=5 // pred_region
        %s194 = ssub.s32 %s21, 1
        // Predicated region
        $region13: #{tpu_custom_call.1} parent=11 // pred_check
          %p195 = pneg %p110
        $region14: #{tpu_custom_call.1} parent=11 // pred_check_branch
          %197 = sbr.rel (%p195) target = $region16
        $region15: #{tpu_custom_call.1} parent=11 // pred_region
          %s199 = ssub.s32 512, 512
          %200 = vsyncadd [#allocation6], %s199
          %s201 = sshll.u32 [#allocation7], 4
          %s202 = int_to_ptr.vmem [resolvable:$true] %s201
          %207 = dma.hbm_to_vmem [thread:$0]  %s2, 512, %s202, [#allocation6], 128, 128, 8
        $region16: #{tpu_custom_call.1} parent=11 // pred_fallthru
          _
        // Predicated region
        $region17: #{tpu_custom_call.1} parent=11 // pred_check
          %p208 = pneg %p131
        $region18: #{tpu_custom_call.1} parent=11 // pred_check_branch
          %210 = sbr.rel (%p208) target = $region20
        $region19: #{tpu_custom_call.1} parent=11 // pred_region
          %s212 = ssub.s32 512, 512
          %213 = vsyncadd [#allocation9], %s212
          %s214 = sshll.u32 [#allocation8], 4
          %s215 = int_to_ptr.vmem [resolvable:$true] %s214
          %220 = dma.hbm_to_vmem [thread:$0]  %s3, 512, %s215, [#allocation9], 128, 128, 8
        $region20: #{tpu_custom_call.1} parent=11 // pred_fallthru
          _
        // Predicated region
        $region21: #{tpu_custom_call.1} parent=11 // pred_check
          %p221 = pneg %p152
        $region22: #{tpu_custom_call.1} parent=11 // pred_check_branch
          %223 = sbr.rel (%p221) target = $region24
        $region23: #{tpu_custom_call.1} parent=11 // pred_region
          %s225 = ssub.s32 512, 512
          %226 = vsyncadd [#allocation9], %s225
          %s227 = sshll.u32 [#allocation10], 4
          %s228 = int_to_ptr.vmem [resolvable:$true] %s227
          %233 = dma.hbm_to_vmem [thread:$0]  %s4, 512, %s228, [#allocation9], 128, 128, 8
        $region24: #{tpu_custom_call.1} parent=11 // pred_fallthru
          _
      $region12: #{tpu_custom_call.1} parent=5 // pred_fallthru
        _
      %p234 = scmp.lt.s32.totalorder %s21, 2
      // Predicated region
      $region25: #{tpu_custom_call.1} parent=5 // pred_check
        %p235 = pneg %p234
      $region26: #{tpu_custom_call.1} parent=5 // pred_check_branch
        %237 = sbr.rel (%p235) target = $region28
      $region27: #{tpu_custom_call.1} parent=5 // pred_region
        // Predicated region
        $region29: #{tpu_custom_call.1} parent=27 // pred_check
          %p238 = pneg %p55
        $region30: #{tpu_custom_call.1} parent=27 // pred_check_branch
          %240 = sbr.rel (%p238) target = $region32
        $region31: #{tpu_custom_call.1} parent=27 // pred_region
          %s241 = sand.u32 %s45, 1
          %s242 = scalar_lea.sflag [#allocation3], %s241
          %s243 = sand.u32 %s45, 1
          %s244 = smul.addr %s243, 64
          %s245 = scalar_lea.vmem [#allocation2], %s244
          %s246 = smul.u32 2, %s29
          %s248 = ssub.s32 1024, 1024
          %249 = vsyncadd %s242, %s248
          %s250 = smul.addr %s28, 8
          %s251 = sadd.s32 %s246, %s250
          %s252 = smul.addr %s251, 128
          %s253 = scalar_lea.hbm %s0, %s252
          %s254 = sshll.u32 %s245, 4
          %s255 = int_to_ptr.vmem [resolvable:$true] %s254
          %260 = dma.hbm_to_vmem [thread:$0]  %s253, 1024, %s255, %s242, 256, 256, 16
        $region32: #{tpu_custom_call.1} parent=27 // pred_fallthru
          _
        // Predicated region
        $region33: #{tpu_custom_call.1} parent=27 // pred_check
          %p261 = pneg %p83
        $region34: #{tpu_custom_call.1} parent=27 // pred_check_branch
          %263 = sbr.rel (%p261) target = $region36
        $region35: #{tpu_custom_call.1} parent=27 // pred_region
          %s264 = sand.u32 %s21, 1
          %s265 = scalar_lea.sflag [#allocation6], %s264
          %s266 = sand.u32 %s73, 1
          %s267 = smul.addr %s266, 256
          %s268 = scalar_lea.vmem [#allocation5], %s267
          %s269 = smul.u32 2, %s29
          %s271 = ssub.s32 4096, 4096
          %272 = vsyncadd %s265, %s271
          %s273 = smul.addr %s28, 32
          %s274 = sadd.s32 %s269, %s273
          %s275 = smul.addr %s274, 128
          %s276 = scalar_lea.hbm %s1, %s275
          %s277 = sshll.u32 %s268, 4
          %s278 = int_to_ptr.vmem [resolvable:$true] %s277
          %283 = dma.hbm_to_vmem [thread:$0]  %s276, 4096, %s278, %s265, 256, 256, 16
        $region36: #{tpu_custom_call.1} parent=27 // pred_fallthru
          _
      $region28: #{tpu_custom_call.1} parent=5 // pred_fallthru
        _
      %p284 = scmp.le.s32.totalorder 1, %s21
      %p285 = scmp.lt.s32.totalorder %s21, 3
      %p286 = pnand %p284, %p285
      %p287 = pneg %p286
      // Predicated region
      $region37: #{tpu_custom_call.1} parent=5 // pred_check
        _
      $region38: #{tpu_custom_call.1} parent=5 // pred_check_branch
        %289 = sbr.rel (%p286) target = $region40
      $region39: #{tpu_custom_call.1} parent=5 // pred_region
        %s290 = ssub.s32 %s21, 1
        %s291 = sand.u32 %s48, 1
        %s292 = scalar_lea.sflag [#allocation3], %s291
        %s293 = sand.u32 %s48, 1
        %s294 = smul.addr %s293, 64
        %s295 = scalar_lea.vmem [#allocation2], %s294
        // Predicated region
        $region41: #{tpu_custom_call.1} parent=39 // pred_check
          %p296 = pneg %p61
        $region42: #{tpu_custom_call.1} parent=39 // pred_check_branch
          %298 = sbr.rel (%p296) target = $region44
        $region43: #{tpu_custom_call.1} parent=39 // pred_region
          %299 = dma.done %s292, 1024
        $region44: #{tpu_custom_call.1} parent=39 // pred_fallthru
          _
        %s300 = sand.u32 %s26, 1
        %s301 = scalar_lea.sflag [#allocation6], %s300
        %s302 = sand.u32 %s76, 1
        %s303 = smul.addr %s302, 256
        %s304 = scalar_lea.vmem [#allocation5], %s303
        // Predicated region
        $region45: #{tpu_custom_call.1} parent=39 // pred_check
          %p305 = pneg %p89
        $region46: #{tpu_custom_call.1} parent=39 // pred_check_branch
          %307 = sbr.rel (%p305) target = $region48
        $region47: #{tpu_custom_call.1} parent=39 // pred_region
          %308 = dma.done %s301, 4096
        $region48: #{tpu_custom_call.1} parent=39 // pred_fallthru
          _
        // Predicated region
        $region49: #{tpu_custom_call.1} parent=39 // pred_check
          %p309 = pneg %p110
        $region50: #{tpu_custom_call.1} parent=39 // pred_check_branch
          %311 = sbr.rel (%p309) target = $region52
        $region51: #{tpu_custom_call.1} parent=39 // pred_region
          %312 = dma.done [#allocation6], 512
        $region52: #{tpu_custom_call.1} parent=39 // pred_fallthru
          _
        // Predicated region
        $region53: #{tpu_custom_call.1} parent=39 // pred_check
          %p313 = pneg %p131
        $region54: #{tpu_custom_call.1} parent=39 // pred_check_branch
          %315 = sbr.rel (%p313) target = $region56
        $region55: #{tpu_custom_call.1} parent=39 // pred_region
          %316 = dma.done [#allocation9], 512
        $region56: #{tpu_custom_call.1} parent=39 // pred_fallthru
          _
        // Predicated region
        $region57: #{tpu_custom_call.1} parent=39 // pred_check
          %p317 = pneg %p152
        $region58: #{tpu_custom_call.1} parent=39 // pred_check_branch
          %319 = sbr.rel (%p317) target = $region60
        $region59: #{tpu_custom_call.1} parent=39 // pred_region
          %320 = dma.done [#allocation9], 512
        $region60: #{tpu_custom_call.1} parent=39 // pred_fallthru
          _
        %s321 = sand.u32 %s48, 1
        %s322 = scalar_lea.sflag [#allocation3], %s321
        %s323 = sand.u32 %s48, 1
        %s324 = smul.addr %s323, 64
        %s325 = scalar_lea.vmem [#allocation2], %s324
        %p326 = pneg %p61
        %p327 = pneg %p58
        %s328 = sand.u32 %s26, 1
        %s329 = scalar_lea.sflag [#allocation6], %s328
        %s330 = sand.u32 %s76, 1
        %s331 = smul.addr %s330, 256
        %s332 = scalar_lea.vmem [#allocation5], %s331
        %p333 = pneg %p89
        %p334 = pneg %p86
        %p335 = pneg %p110
        %p336 = pneg %p107
        %p337 = pneg %p131
        %p338 = pneg %p128
        %p339 = pneg %p152
        %p340 = pneg %p149
        %p341 = pneg %p180
        %p342 = pneg %p177
        %s343 = sand.u32 %s167, 1
        %s344 = scalar_lea.sflag [#allocation4], %s343
        %s345 = sand.u32 %s167, 1
        %s346 = smul.addr %s345, 64
        %s347 = scalar_lea.vmem [#allocation11], %s346
        %s348 = smul.u32 2, %s31
        %s349 = smul.u32 2, %s31
        %s350 = smul.u32 2, %s31
        %v351 = vld [vmem:[#allocation7] sm:$0xff]
        %v352 = vld [vmem:[#allocation7 + $0x8] sm:$0xff]
        %v353 = vld [vmem:[#allocation7 + $0x10] sm:$0xff]
        %v354 = vld [vmem:[#allocation7 + $0x18] sm:$0xff]
        %v355 = vld [vmem:[#allocation8] sm:$0xff]
        %v356 = vld [vmem:[#allocation8 + $0x8] sm:$0xff]
        %v357 = vld [vmem:[#allocation8 + $0x10] sm:$0xff]
        %v358 = vld [vmem:[#allocation8 + $0x18] sm:$0xff]
        %v359 = vld [vmem:[#allocation10] sm:$0xff]
        %v360 = vld [vmem:[#allocation10 + $0x8] sm:$0xff]
        %v361 = vld [vmem:[#allocation10 + $0x10] sm:$0xff]
        %v362 = vld [vmem:[#allocation10 + $0x18] sm:$0xff]
        %v363 = vld [vmem:[%s295] sm:$0xff]
        %v364 = vld [vmem:[%s295 + $0x8] sm:$0xff]
        %v365 = vld [vmem:[%s295 + $0x10] sm:$0xff]
        %v366 = vld [vmem:[%s295 + $0x18] sm:$0xff]
        %v367 = vld [vmem:[%s295 + $0x20] sm:$0xff]
        %v368 = vld [vmem:[%s295 + $0x28] sm:$0xff]
        %v369 = vld [vmem:[%s295 + $0x30] sm:$0xff]
        %v370 = vld [vmem:[%s295 + $0x38] sm:$0xff]
        %v371 = vld [vmem:[%s304] sm:$0xff]
        %v372 = vld [vmem:[%s304 + $0x8] sm:$0xff]
        %v373 = vld [vmem:[%s304 + $0x10] sm:$0xff]
        %v374 = vld [vmem:[%s304 + $0x18] sm:$0xff]
        %v375 = vld [vmem:[%s304 + $0x20] sm:$0xff]
        %v376 = vld [vmem:[%s304 + $0x28] sm:$0xff]
        %v377 = vld [vmem:[%s304 + $0x30] sm:$0xff]
        %v378 = vld [vmem:[%s304 + $0x38] sm:$0xff]
        %v379 = vld [vmem:[%s304 + $0x40] sm:$0xff]
        %v380 = vld [vmem:[%s304 + $0x48] sm:$0xff]
        %v381 = vld [vmem:[%s304 + $0x50] sm:$0xff]
        %v382 = vld [vmem:[%s304 + $0x58] sm:$0xff]
        %v383 = vld [vmem:[%s304 + $0x60] sm:$0xff]
        %v384 = vld [vmem:[%s304 + $0x68] sm:$0xff]
        %v385 = vld [vmem:[%s304 + $0x70] sm:$0xff]
        %v386 = vld [vmem:[%s304 + $0x78] sm:$0xff]
        %v387 = vld [vmem:[%s304 + $0x80] sm:$0xff]
        %v388 = vld [vmem:[%s304 + $0x88] sm:$0xff]
        %v389 = vld [vmem:[%s304 + $0x90] sm:$0xff]
        %v390 = vld [vmem:[%s304 + $0x98] sm:$0xff]
        %v391 = vld [vmem:[%s304 + $0xa0] sm:$0xff]
        %v392 = vld [vmem:[%s304 + $0xa8] sm:$0xff]
        %v393 = vld [vmem:[%s304 + $0xb0] sm:$0xff]
        %v394 = vld [vmem:[%s304 + $0xb8] sm:$0xff]
        %v395 = vld [vmem:[%s304 + $0xc0] sm:$0xff]
        %v396 = vld [vmem:[%s304 + $0xc8] sm:$0xff]
        %v397 = vld [vmem:[%s304 + $0xd0] sm:$0xff]
        %v398 = vld [vmem:[%s304 + $0xd8] sm:$0xff]
        %v399 = vld [vmem:[%s304 + $0xe0] sm:$0xff]
        %v400 = vld [vmem:[%s304 + $0xe8] sm:$0xff]
        %v401 = vld [vmem:[%s304 + $0xf0] sm:$0xff]
        %v402 = vld [vmem:[%s304 + $0xf8] sm:$0xff]
        %403 = vmatprep.subr.mxu0 %v372
        %404 = vmatpush1.msra.mxu0 %v371
        %405 = vmatprep.subr.mxu0 %v374
        %406 = vmatpush1.msra.mxu0 %v373
        %407 = vmatprep.subr.mxu0 %v376
        %408 = vmatpush1.msra.mxu0 %v375
        %409 = vmatprep.subr.mxu0 %v378
        %410 = vmatpush1.msra.mxu0 %v377
        %411 = vmatprep.subr.mxu0 %v380
        %412 = vmatpush1.msra.mxu0 %v379
        %413 = vmatprep.subr.mxu0 %v382
        %414 = vmatpush1.msra.mxu0 %v381
        %415 = vmatprep.subr.mxu0 %v384
        %416 = vmatpush1.msra.mxu0 %v383
        %417 = vmatprep.subr.mxu0 %v386
        %418 = vmatpush1.msra.mxu0 %v385
        %419 = vmatprep.subr.mxu0 %v388
        %420 = vmatpush1.msra.mxu0 %v387
        %421 = vmatprep.subr.mxu0 %v390
        %422 = vmatpush1.msra.mxu0 %v389
        %423 = vmatprep.subr.mxu0 %v392
        %424 = vmatpush1.msra.mxu0 %v391
        %425 = vmatprep.subr.mxu0 %v394
        %426 = vmatpush1.msra.mxu0 %v393
        %427 = vmatprep.subr.mxu0 %v396
        %428 = vmatpush1.msra.mxu0 %v395
        %429 = vmatprep.subr.mxu0 %v398
        %430 = vmatpush1.msra.mxu0 %v397
        %431 = vmatprep.subr.mxu0 %v400
        %432 = vmatpush1.msra.mxu0 %v399
        %433 = vmatprep.subr.mxu0 %v402
        %434 = vmatpush1.msra.mxu0 %v401
        %435 = vmatprep.subr.mxu0 0.0
        %436 = vmatpush1.msra.mxu0 0.0
        %437 = vmatprep.subr.mxu0 0.0
        %438 = vmatpush1.msra.mxu0 0.0
        %439 = vmatprep.subr.mxu0 0.0
        %440 = vmatpush1.msra.mxu0 0.0
        %441 = vmatprep.subr.mxu0 0.0
        %442 = vmatpush1.msra.mxu0 0.0
        %443 = vmatprep.subr.mxu0 0.0
        %444 = vmatpush1.msra.mxu0 0.0
        %445 = vmatprep.subr.mxu0 0.0
        %446 = vmatpush1.msra.mxu0 0.0
        %447 = vmatprep.subr.mxu0 0.0
        %448 = vmatpush1.msra.mxu0 0.0
        %449 = vmatprep.subr.mxu0 0.0
        %450 = vmatpush1.msra.mxu0 0.0
        %451 = vmatprep.subr.mxu0 0.0
        %452 = vmatpush1.msra.mxu0 0.0
        %453 = vmatprep.subr.mxu0 0.0
        %454 = vmatpush1.msra.mxu0 0.0
        %455 = vmatprep.subr.mxu0 0.0
        %456 = vmatpush1.msra.mxu0 0.0
        %457 = vmatprep.subr.mxu0 0.0
        %458 = vmatpush1.msra.mxu0 0.0
        %459 = vmatprep.subr.mxu0 0.0
        %460 = vmatpush1.msra.mxu0 0.0
        %461 = vmatprep.subr.mxu0 0.0
        %462 = vmatpush1.msra.mxu0 0.0
        %463 = vmatprep.subr.mxu0 0.0
        %464 = vmatpush1.msra.mxu0 0.0
        %465 = vmatprep.subr.mxu0 0.0
        %466 = vmatpush1.msra.mxu0 0.0
        %467 = vmatprep.mubr.f32.mxu0 0.0
        %468 = vmatmul.mubr.f32.gmra.mrb[0].mxu0 %v355
        %v469 = vpop.f32.mrb[0].mxu0
        %v470 = vadd.f32 0.0, %v469
        %v471 = vpop.f32.mrb[0].mxu0
        %v472 = vadd.f32 0.0, %v471
        %473 = vmatprep.mubr.f32.mxu0 0.0
        %474 = vmatmul.mubr.f32.gmra.mrb[0].mxu0 %v356
        %v475 = vpop.f32.mrb[0].mxu0
        %v476 = vadd.f32 0.0, %v475
        %v477 = vpop.f32.mrb[0].mxu0
        %v478 = vadd.f32 0.0, %v477
        %479 = vmatprep.mubr.f32.mxu0 0.0
        %480 = vmatmul.mubr.f32.gmra.mrb[0].mxu0 %v357
        %v481 = vpop.f32.mrb[0].mxu0
        %v482 = vadd.f32 0.0, %v481
        %v483 = vpop.f32.mrb[0].mxu0
        %v484 = vadd.f32 0.0, %v483
        %485 = vmatprep.mubr.f32.mxu0 0.0
        %486 = vmatmul.mubr.f32.gmra.mrb[0].mxu0 %v358
        %v487 = vpop.f32.mrb[0].mxu0
        %v488 = vadd.f32 0.0, %v487
        %v489 = vpop.f32.mrb[0].mxu0
        %v490 = vadd.f32 0.0, %v489
        %491 = vdwg.mxu0
        %vm492 = vcmask 261120
        %v494 = vsel %vm492, %v351, 0
        %v497 = vsel %vm492, %v352, 0
        %v500 = vsel %vm492, %v353, 0
        %v503 = vsel %vm492, %v354, 0
        %505 = vmatprep.subr.mxu0 %v364
        %506 = vmatpush1.msra.mxu0 %v363
        %507 = vmatprep.subr.mxu0 %v366
        %508 = vmatpush1.msra.mxu0 %v365
        %509 = vmatprep.subr.mxu0 %v368
        %510 = vmatpush1.msra.mxu0 %v367
        %511 = vmatprep.subr.mxu0 %v370
        %512 = vmatpush1.msra.mxu0 %v369
        %513 = vmatprep.subr.mxu0 0.0
        %514 = vmatpush1.msra.mxu0 0.0
        %515 = vmatprep.subr.mxu0 0.0
        %516 = vmatpush1.msra.mxu0 0.0
        %517 = vmatprep.subr.mxu0 0.0
        %518 = vmatpush1.msra.mxu0 0.0
        %519 = vmatprep.subr.mxu0 0.0
        %520 = vmatpush1.msra.mxu0 0.0
        %521 = vmatprep.subr.mxu0 0.0
        %522 = vmatpush1.msra.mxu0 0.0
        %523 = vmatprep.subr.mxu0 0.0
        %524 = vmatpush1.msra.mxu0 0.0
        %525 = vmatprep.subr.mxu0 0.0
        %526 = vmatpush1.msra.mxu0 0.0
        %527 = vmatprep.subr.mxu0 0.0
        %528 = vmatpush1.msra.mxu0 0.0
        %529 = vmatprep.subr.mxu0 0.0
        %530 = vmatpush1.msra.mxu0 0.0
        %531 = vmatprep.subr.mxu0 0.0
        %532 = vmatpush1.msra.mxu0 0.0
        %533 = vmatprep.subr.mxu0 0.0
        %534 = vmatpush1.msra.mxu0 0.0
        %535 = vmatprep.subr.mxu0 0.0
        %536 = vmatpush1.msra.mxu0 0.0
        %537 = vmatprep.subr.mxu0 0.0
        %538 = vmatpush1.msra.mxu0 0.0
        %539 = vmatprep.subr.mxu0 0.0
        %540 = vmatpush1.msra.mxu0 0.0
        %541 = vmatprep.subr.mxu0 0.0
        %542 = vmatpush1.msra.mxu0 0.0
        %543 = vmatprep.subr.mxu0 0.0
        %544 = vmatpush1.msra.mxu0 0.0
        %545 = vmatprep.subr.mxu0 0.0
        %546 = vmatpush1.msra.mxu0 0.0
        %547 = vmatprep.subr.mxu0 0.0
        %548 = vmatpush1.msra.mxu0 0.0
        %549 = vmatprep.subr.mxu0 0.0
        %550 = vmatpush1.msra.mxu0 0.0
        %551 = vmatprep.subr.mxu0 0.0
        %552 = vmatpush1.msra.mxu0 0.0
        %553 = vmatprep.subr.mxu0 0.0
        %554 = vmatpush1.msra.mxu0 0.0
        %555 = vmatprep.subr.mxu0 0.0
        %556 = vmatpush1.msra.mxu0 0.0
        %557 = vmatprep.subr.mxu0 0.0
        %558 = vmatpush1.msra.mxu0 0.0
        %559 = vmatprep.subr.mxu0 0.0
        %560 = vmatpush1.msra.mxu0 0.0
        %561 = vmatprep.subr.mxu0 0.0
        %562 = vmatpush1.msra.mxu0 0.0
        %563 = vmatprep.subr.mxu0 0.0
        %564 = vmatpush1.msra.mxu0 0.0
        %565 = vmatprep.subr.mxu0 0.0
        %566 = vmatpush1.msra.mxu0 0.0
        %567 = vmatprep.subr.mxu0 0.0
        %568 = vmatpush1.msra.mxu0 0.0
        %569 = vmatprep.mubr.f32.mxu0 0.0
        %570 = vmatmul.mubr.f32.gmra.mrb[0].mxu0 %v494
        %v571 = vpop.f32.mrb[0].mxu0
        %v572 = vadd.f32 %v470, %v571
        %v573 = vpop.f32.mrb[0].mxu0
        %v574 = vadd.f32 %v472, %v573
        %575 = vmatprep.mubr.f32.mxu0 0.0
        %576 = vmatmul.mubr.f32.gmra.mrb[0].mxu0 %v497
        %v577 = vpop.f32.mrb[0].mxu0
        %v578 = vadd.f32 %v476, %v577
        %v579 = vpop.f32.mrb[0].mxu0
        %v580 = vadd.f32 %v478, %v579
        %581 = vmatprep.mubr.f32.mxu0 0.0
        %582 = vmatmul.mubr.f32.gmra.mrb[0].mxu0 %v500
        %v583 = vpop.f32.mrb[0].mxu0
        %v584 = vadd.f32 %v482, %v583
        %v585 = vpop.f32.mrb[0].mxu0
        %v586 = vadd.f32 %v484, %v585
        %587 = vmatprep.mubr.f32.mxu0 0.0
        %588 = vmatmul.mubr.f32.gmra.mrb[0].mxu0 %v503
        %v589 = vpop.f32.mrb[0].mxu0
        %v590 = vadd.f32 %v488, %v589
        %v591 = vpop.f32.mrb[0].mxu0
        %v592 = vadd.f32 %v490, %v591
        %593 = vdwg.mxu0
        %595 = vset.pattern.permute.xlu0 0
        %596 = vperm.xlu0 %595, %v359
        %v597 = vpop.permute.xlu0 %596
        %600 = vset.pattern.permute.xlu0 0
        %601 = vperm.xlu0 %600, %v360
        %v602 = vpop.permute.xlu0 %601
        %605 = vset.pattern.permute.xlu0 0
        %606 = vperm.xlu0 %605, %v361
        %v607 = vpop.permute.xlu0 %606
        %610 = vset.pattern.permute.xlu0 0
        %611 = vperm.xlu0 %610, %v362
        %v612 = vpop.permute.xlu0 %611
        %v614 = vadd.f32 %v572, %v597
        %v615 = vadd.f32 %v574, %v597
        %v616 = vadd.f32 %v578, %v602
        %v617 = vadd.f32 %v580, %v602
        %v618 = vadd.f32 %v584, %v607
        %v619 = vadd.f32 %v586, %v607
        %v620 = vadd.f32 %v590, %v612
        %v621 = vadd.f32 %v592, %v612
        %v622 = vmax.f32 %v614, 0.0
        %v623 = vmax.f32 %v615, 0.0
        %v624 = vmax.f32 %v616, 0.0
        %v625 = vmax.f32 %v617, 0.0
        %v626 = vmax.f32 %v618, 0.0
        %v627 = vmax.f32 %v619, 0.0
        %v628 = vmax.f32 %v620, 0.0
        %v629 = vmax.f32 %v621, 0.0
        %630 = vst [vmem:[%s347] sm:$0xff] %v622
        %631 = vst [vmem:[%s347 + $0x8] sm:$0xff] %v623
        %632 = vst [vmem:[%s347 + $0x10] sm:$0xff] %v624
        %633 = vst [vmem:[%s347 + $0x18] sm:$0xff] %v625
        %634 = vst [vmem:[%s347 + $0x20] sm:$0xff] %v626
        %635 = vst [vmem:[%s347 + $0x28] sm:$0xff] %v627
        %636 = vst [vmem:[%s347 + $0x30] sm:$0xff] %v628
        %637 = vst [vmem:[%s347 + $0x38] sm:$0xff] %v629
        %s638 = sand.u32 %s167, 1
        %s639 = scalar_lea.sflag [#allocation4], %s638
        %s640 = sand.u32 %s167, 1
        %s641 = smul.addr %s640, 64
        %s642 = scalar_lea.vmem [#allocation11], %s641
        // Predicated region
        $region61: #{tpu_custom_call.1} parent=39 // pred_check
          %p643 = pneg %p177
        $region62: #{tpu_custom_call.1} parent=39 // pred_check_branch
          %645 = sbr.rel (%p643) target = $region64
        $region63: #{tpu_custom_call.1} parent=39 // pred_region
          %s646 = smul.u32 2, %s31
          %s648 = ssub.s32 1024, 1024
          %649 = vsyncadd %s639, %s648
          %s650 = smul.addr %s30, 8
          %s651 = sadd.s32 %s646, %s650
          %s652 = smul.addr %s651, 128
          %s653 = scalar_lea.hbm %s5, %s652
          %s654 = sshll.u32 %s642, 4
          %s655 = int_to_ptr.vmem [resolvable:$true] %s654
          %660 = dma.vmem_to_hbm [thread:$0]  %s655, 1024, %s653, %s639, 256, 256, 16
        $region64: #{tpu_custom_call.1} parent=39 // pred_fallthru
          _
      $region40: #{tpu_custom_call.1} parent=5 // pred_fallthru
        _
      %p661 = scmp.le.s32.totalorder 2, %s21
      // Predicated region
      $region65: #{tpu_custom_call.1} parent=5 // pred_check
        %p662 = pneg %p661
      $region66: #{tpu_custom_call.1} parent=5 // pred_check_branch
        %664 = sbr.rel (%p662) target = $region68
      $region67: #{tpu_custom_call.1} parent=5 // pred_region
        %s665 = ssub.s32 %s21, 2
        // Predicated region
        $region69: #{tpu_custom_call.1} parent=67 // pred_check
          %p666 = pneg %p183
        $region70: #{tpu_custom_call.1} parent=67 // pred_check_branch
          %668 = sbr.rel (%p666) target = $region72
        $region71: #{tpu_custom_call.1} parent=67 // pred_region
          %s669 = sand.u32 %s168, 1
          %s670 = scalar_lea.sflag [#allocation4], %s669
          %s671 = sand.u32 %s168, 1
          %s672 = smul.addr %s671, 64
          %s673 = scalar_lea.vmem [#allocation11], %s672
          %674 = dma.done %s670, 1024
        $region72: #{tpu_custom_call.1} parent=67 // pred_fallthru
          _
      $region68: #{tpu_custom_call.1} parent=5 // pred_fallthru
        _
    $region6: #{tpu_custom_call.1} parent=1 // loop_footer
      %s25 = sadd.s32 1, %s21
    $region7: #{tpu_custom_call.1} parent=1 // loop_footer_branch
      %20 = sbr.rel target = $region3
    $region8: #{tpu_custom_call.1} parent=1 // loop_exit
      _
    %675 = vsyncpa [#allocation3], 1
    %s676 = scalar_lea.sflag [#allocation3], 1
    %677 = vsyncpa %s676, 1
    %678 = vsyncpa [#allocation6], 1
    %s679 = scalar_lea.sflag [#allocation6], 1
    %680 = vsyncpa %s679, 1
    %681 = vsyncpa [#allocation9], 1
    %682 = vsyncpa [#allocation4], 1
    %s683 = scalar_lea.sflag [#allocation4], 1
    %684 = vsyncpa %s683, 1

</llo_original>
